<compile_context>
chip_gen: v7x
topology: tpu7x:2x2x1
jax: 0.10.0
libtpu: 0.0.40
codegen_flags: <defaults>
</compile_context>

<pallas_src>
import jax
import jax.numpy as jnp
from jax.experimental import pallas as pl
from jax.experimental.pallas import tpu as pltpu


LANE = 128


def _round_up(v, m):
    return ((v + m - 1) // m) * m


def _pick_tile(n_pad, candidates):
    for c in candidates:
        if n_pad % c == 0:
            return c
    # n_pad is always a multiple of LANE here, so 128 always divides; clamp the fallback
    # anyway so a future change can never silently produce an N_p-wide tile.
    return min(n_pad, LANE)


def _maybe_pad(a, target_shape):
    pads = tuple((0, t - s) for s, t in zip(a.shape, target_shape))
    if all(p == (0, 0) for p in pads):
        return a
    return jnp.pad(a, pads)


def _vmem_budget_bytes():
    """Generation-aware VMEM budget: ~48 MiB on v7x (64 MiB / TC physical),
    ~96 MiB on v5e / v6e (128 MiB physical).  Conservative fallback if unknown."""
    cap = None
    try:
        info = pltpu.get_tpu_info()
        cap = getattr(info, "vmem_capacity_bytes", None)
    except Exception:
        cap = None
    if cap is None:
        return 48 * 1024 * 1024
    if cap <= 64 * 1024 * 1024:          # v7x: 64 MiB per TensorCore
        return 48 * 1024 * 1024
    return 96 * 1024 * 1024              # v5e / v6e: 128 MiB physical


def _select_pass2_tiles(N_p, D_out_p, adj_isz, cd_isz, out_isz, budget):
    """Pick (tm, tk, support_resident) maximizing tile size under the VMEM budget."""
    tm_cands = [t for t in (512, 256, 128) if N_p % t == 0] or [128]
    tk_cands = [t for t in (2048, 1024, 512, 256, 128) if N_p % t == 0] or [128]

    def vmem(tm, tk, resident):
        sup_rows = N_p if resident else tk
        return (2 * sup_rows * D_out_p * cd_isz    # support (double-buffered)
                + 2 * tm * tk * adj_isz            # adj tile (double-buffered)
                + 2 * tm * D_out_p * out_isz       # output tile
                + tm * D_out_p * 4)                # f32 accumulator scratch

    for resident in (True, False):
        for tm in tm_cands:
            for tk in tk_cands:
                if vmem(tm, tk, resident) <= budget:
                    return tm, tk, resident
    return tm_cands[-1], tk_cands[-1], False


# ---------------- Pass 1: support = x @ W^T + b ----------------
def _support_kernel(x_ref, w_ref, b_ref, s_ref, acc_ref):
    # x_ref: (tm1, ti) original dtype, w_ref: (ti, to) compute dtype,
    # b_ref: (1, to) f32, s_ref: (tm1, to) compute dtype, acc_ref: (tm1, to) f32.
    d = pl.program_id(3)

    @pl.when(d == 0)
    def _():
        acc_ref[...] = jnp.zeros_like(acc_ref)

    x = x_ref[...].astype(w_ref.dtype)          # in-kernel cast, f32 accumulate on MXU
    acc_ref[...] += jnp.dot(x, w_ref[...], preferred_element_type=jnp.float32)

    @pl.when(d == pl.num_programs(3) - 1)
    def _():
        s_ref[...] = (acc_ref[...] + b_ref[...]).astype(s_ref.dtype)


# ---------------- Pass 2: out = relu(adj @ support) ----------------
def _make_aggregate_kernel(tk, support_resident):
    def kernel(adj_ref, s_ref, o_ref, acc_ref):
        # adj_ref: (tm, tk) original dtype, s_ref: (N_p, D_out_p) if resident else
        # (tk, D_out_p) compute dtype, o_ref: (tm, D_out_p), acc_ref f32.
        k = pl.program_id(2)

        @pl.when(k == 0)
        def _():
            acc_ref[...] = jnp.zeros_like(acc_ref)

        if support_resident:
            off = pl.multiple_of(k * tk, tk)
            s = s_ref[pl.ds(off, tk), :]
        else:
            s = s_ref[...]
        adj = adj_ref[...].astype(s.dtype)      # per-tile cast, hidden under adj DMA
        acc_ref[...] += jnp.dot(adj, s, preferred_element_type=jnp.float32)

        @pl.when(k == pl.num_programs(2) - 1)
        def _():
            o_ref[...] = jnp.maximum(acc_ref[...], 0.0).astype(o_ref.dtype)

    return kernel


def gnn_layer(x, adj, w, b, *, compute_dtype=jnp.bfloat16):
    """x: [B,N,D_in], adj: [B,N,N], w: [D_out,D_in], b: [D_out] -> [B,N,D_out].

    compute_dtype feeds the MXU (accumulation is always f32).  Default bf16 halves the
    N^2 adj HBM traffic and doubles MXU rate; pass jnp.float32 for an exact path.
    """
    B, N, D_in = x.shape
    D_out = w.shape[0]
    out_dtype = x.dtype
    cd = jnp.dtype(compute_dtype)

    # ---- padding (plain-JAX glue): lane-dense features, tileable node dim ----
    D_in_p = _round_up(D_in, LANE)
    D_out_p = _round_up(D_out, LANE)
    N_p = _round_up(N, LANE)

    budget = _vmem_budget_bytes()

    # x / adj stay in their original dtype (cast happens inside the kernels); they are
    # only padded when the shape actually needs it -> no extra HBM pass over adj when
    # N, D_in are already multiples of 128.
    x_p = _maybe_pad(x, (B, N_p, D_in_p))
    adj_p = _maybe_pad(adj, (B, N_p, N_p))
    w_t = _maybe_pad(w.T, (D_in_p, D_out_p)).astype(cd)
    b_p = _maybe_pad(b, (D_out_p,)).reshape(1, D_out_p).astype(jnp.float32)

    # ---- pass 1: materialize support once, tiled over nodes / D_out / D_in ----
    tm1 = _pick_tile(N_p, (512, 256, 128))
    to = _pick_tile(D_out_p, (512, 256, 128))
    ti = _pick_tile(D_in_p, (1024, 512, 256, 128))

    support = pl.pallas_call(
        _support_kernel,
        out_shape=jax.ShapeDtypeStruct((B, N_p, D_out_p), cd),
        grid_spec=pltpu.PrefetchScalarGridSpec(
            num_scalar_prefetch=0,
            grid=(B, N_p // tm1, D_out_p // to, D_in_p // ti),
            in_specs=[
                pl.BlockSpec((None, tm1, ti), lambda bb, i, j, d: (bb, i, d)),
                pl.BlockSpec((ti, to), lambda bb, i, j, d: (d, j)),
                pl.BlockSpec((1, to), lambda bb, i, j, d: (0, j)),
            ],
            out_specs=pl.BlockSpec((None, tm1, to), lambda bb, i, j, d: (bb, i, j)),
            scratch_shapes=[pltpu.VMEM((tm1, to), jnp.float32)],
        ),
        compiler_params=pltpu.CompilerParams(
            dimension_semantics=("parallel", "parallel", "parallel", "arbitrary"),
            vmem_limit_bytes=budget,
        ),
    )(x_p, w_t, b_p)

    # ---- pass 2: tiled adj @ support, support slab resident in VMEM when it fits ----
    tm, tk, resident = _select_pass2_tiles(
        N_p, D_out_p,
        adj_isz=jnp.dtype(adj_p.dtype).itemsize,
        cd_isz=cd.itemsize,
        out_isz=jnp.dtype(out_dtype).itemsize,
        budget=budget,
    )

    if resident:
        # Support block index is constant over (i, k): DMA'd once per batch.
        support_spec = pl.BlockSpec((None, N_p, D_out_p), lambda bb, i, k: (bb, 0, 0))
    else:
        support_spec = pl.BlockSpec((None, tk, D_out_p), lambda bb, i, k: (bb, k, 0))

    out_p = pl.pallas_call(
        _make_aggregate_kernel(tk, resident),
        out_shape=jax.ShapeDtypeStruct((B, N_p, D_out_p), out_dtype),
        grid_spec=pltpu.PrefetchScalarGridSpec(
            num_scalar_prefetch=0,
            grid=(B, N_p // tm, N_p // tk),
            in_specs=[
                pl.BlockSpec((None, tm, tk), lambda bb, i, k: (bb, i, k)),  # adj tile
                support_spec,
            ],
            out_specs=pl.BlockSpec((None, tm, D_out_p), lambda bb, i, k: (bb, i, 0)),
            scratch_shapes=[pltpu.VMEM((tm, D_out_p), jnp.float32)],
        ),
        compiler_params=pltpu.CompilerParams(
            dimension_semantics=("parallel", "parallel", "arbitrary"),
            vmem_limit_bytes=budget,
        ),
    )(adj_p, support)

    return out_p[:, :N, :D_out]


def gnn_layer_ref(x, adj, w, b):
    support = jnp.einsum("bnd,od->bno", x, w) + b
    out = jnp.einsum("bnm,bmo->bno", adj, support)
    return jnp.maximum(out, 0.0)


if __name__ == "__main__":
    B, N, D_in, D_out = 2, 16, 32, 32

    key = jax.random.PRNGKey(0)
    kx, kadj, kw, kb = jax.random.split(key, 4)

    x = jax.random.normal(kx, (B, N, D_in), dtype=jnp.float32)
    # row-normalized adjacency (values in [0,1])
    adj_raw = jax.random.uniform(kadj, (B, N, N), dtype=jnp.float32)
    adj = adj_raw / jnp.sum(adj_raw, axis=-1, keepdims=True)

    # nn.Linear-style init: U(-1/sqrt(fan_in), 1/sqrt(fan_in))
    bound = 1.0 / jnp.sqrt(jnp.float32(D_in))
    w = jax.random.uniform(kw, (D_out, D_in), dtype=jnp.float32,
                           minval=-bound, maxval=bound)
    b = jax.random.uniform(kb, (D_out,), dtype=jnp.float32,
                           minval=-bound, maxval=bound)

    ref = gnn_layer_ref(x, adj, w, b)

    # Exact path (f32 MXU inputs) -> tight tolerance.
    out_exact = jax.block_until_ready(gnn_layer(x, adj, w, b, compute_dtype=jnp.float32))
    assert out_exact.shape == (B, N, D_out)
    assert jnp.allclose(out_exact, ref, atol=1e-5, rtol=1e-5)

    # Default fast path (bf16 MXU inputs, f32 accumulation) -> looser tolerance.
    out_fast = jax.block_until_ready(gnn_layer(x, adj, w, b))
    assert out_fast.shape == (B, N, D_out)
    assert jnp.allclose(out_fast, ref, atol=5e-2, rtol=5e-2)

    print("KERNEL_OK")
</pallas_src>

<mosaic_0001>
module attributes {stable_mosaic.version = 11 : i64} {
  func.func @_support_kernel(%arg0: i32, %arg1: i32, %arg2: i32, %arg3: i32, %arg4: memref<1x128x128xf32, #tpu.memory_space<vmem>>, %arg5: memref<128x128xf32, #tpu.memory_space<vmem>>, %arg6: memref<1x128xf32, #tpu.memory_space<vmem>>, %arg7: memref<1x128x128xf32, #tpu.memory_space<vmem>>, %arg8: memref<128x128xf32, #tpu.memory_space<vmem>>) attributes {dimension_semantics = [#tpu.dimension_semantics<parallel>, #tpu.dimension_semantics<parallel>, #tpu.dimension_semantics<parallel>, #tpu.dimension_semantics<arbitrary>], iteration_bounds = array<i64: 2, 1, 1, 1>, scalar_prefetch = 0 : i64, scratch_operands = 1 : i64, tpu.core_type = #tpu.core_type<tc>, window_params = [{transform_indices = @transform_0, window_bounds = array<i64: 1, 128, 128>}, {transform_indices = @transform_1, window_bounds = array<i64: 128, 128>}, {transform_indices = @transform_2, window_bounds = array<i64: 1, 128>}, {transform_indices = @transform_3, window_bounds = array<i64: 1, 128, 128>}]} {
    %c0_i32 = arith.constant 0 : i32
    %0 = arith.cmpi eq, %arg3, %c0_i32 : i32
    %1 = arith.extui %0 : i1 to i32
    %c0_i32_0 = arith.constant 0 : i32
    %2 = arith.cmpi ne, %1, %c0_i32_0 : i32
    scf.if %2 {
      %cst_11 = arith.constant 0.000000e+00 : f32
      %13 = vector.broadcast %cst_11 : f32 to vector<128x128xf32>
      %c0_12 = arith.constant 0 : index
      %c0_13 = arith.constant 0 : index
      %14 = vector.load %arg8[%c0_12, %c0_13] : memref<128x128xf32, #tpu.memory_space<vmem>>, vector<128x128xf32>
      tpu.vector_store %arg8[%c0_12, %c0_13], %13 {strides = array<i32>} : memref<128x128xf32, #tpu.memory_space<vmem>>, vector<128x128xf32>,
    } else {
    }
    %c0 = arith.constant 0 : index
    %c0_1 = arith.constant 0 : index
    %c0_2 = arith.constant 0 : index
    %3 = vector.load %arg4[%c0, %c0_1, %c0_2] : memref<1x128x128xf32, #tpu.memory_space<vmem>>, vector<1x128x128xf32>
    %4 = vector.shape_cast %3 : vector<1x128x128xf32> to vector<128x128xf32>
    %c0_3 = arith.constant 0 : index
    %c0_4 = arith.constant 0 : index
    %5 = vector.load %arg8[%c0_3, %c0_4] : memref<128x128xf32, #tpu.memory_space<vmem>>, vector<128x128xf32>
    %c0_5 = arith.constant 0 : index
    %c0_6 = arith.constant 0 : index
    %6 = vector.load %arg5[%c0_5, %c0_6] : memref<128x128xf32, #tpu.memory_space<vmem>>, vector<128x128xf32>
    %cst = arith.constant dense<0.000000e+00> : vector<128x128xf32>
    %7 = tpu.matmul %4, %6, %cst {dimension_numbers = #tpu.dot_dimension_numbers<[1], [0], [0], [1], [0, 0, 1, 1], [], []>} : vector<128x128xf32>, vector<128x128xf32>, vector<128x128xf32> -> vector<128x128xf32>
    %8 = arith.addf %5, %7 : vector<128x128xf32>
    %c0_7 = arith.constant 0 : index
    %c0_8 = arith.constant 0 : index
    %9 = vector.load %arg8[%c0_7, %c0_8] : memref<128x128xf32, #tpu.memory_space<vmem>>, vector<128x128xf32>
    tpu.vector_store %arg8[%c0_7, %c0_8], %8 {strides = array<i32>} : memref<128x128xf32, #tpu.memory_space<vmem>>, vector<128x128xf32>,
    %c0_i32_9 = arith.constant 0 : i32
    %10 = arith.cmpi eq, %arg3, %c0_i32_9 : i32
    %11 = arith.extui %10 : i1 to i32
    %c0_i32_10 = arith.constant 0 : i32
    %12 = arith.cmpi ne, %11, %c0_i32_10 : i32
    scf.if %12 {
      %c0_11 = arith.constant 0 : index
      %c0_12 = arith.constant 0 : index
      %13 = vector.load %arg8[%c0_11, %c0_12] : memref<128x128xf32, #tpu.memory_space<vmem>>, vector<128x128xf32>
      %c0_13 = arith.constant 0 : index
      %c0_14 = arith.constant 0 : index
      %14 = vector.load %arg6[%c0_13, %c0_14] : memref<1x128xf32, #tpu.memory_space<vmem>>, vector<1x128xf32>
      %15 = vector.broadcast %14 : vector<1x128xf32> to vector<128x128xf32>
      %16 = arith.addf %13, %15 : vector<128x128xf32>
      %c0_15 = arith.constant 0 : index
      %c0_16 = arith.constant 0 : index
      %c0_17 = arith.constant 0 : index
      %17 = vector.load %arg7[%c0_15, %c0_16, %c0_17] : memref<1x128x128xf32, #tpu.memory_space<vmem>>, vector<1x128x128xf32>
      %18 = vector.shape_cast %17 : vector<1x128x128xf32> to vector<128x128xf32>
      %19 = vector.shape_cast %16 : vector<128x128xf32> to vector<1x128x128xf32>
      tpu.vector_store %arg7[%c0_15, %c0_16, %c0_17], %19 {strides = array<i32>} : memref<1x128x128xf32, #tpu.memory_space<vmem>>, vector<1x128x128xf32>,
    } else {
    }
    return
  }
  func.func @transform_0(%arg0: i32, %arg1: i32, %arg2: i32, %arg3: i32) -> (i32, i32, i32) {
    %c0_i32 = arith.constant 0 : i32
    return %arg0, %arg1, %arg3 : i32, i32, i32
  }
  func.func @transform_1(%arg0: i32, %arg1: i32, %arg2: i32, %arg3: i32) -> (i32, i32) {
    %c0_i32 = arith.constant 0 : i32
    return %arg3, %arg2 : i32, i32
  }
  func.func @transform_2(%arg0: i32, %arg1: i32, %arg2: i32, %arg3: i32) -> (i32, i32) {
    %c0_i32 = arith.constant 0 : i32
    %c0_i32_0 = arith.constant 0 : i32
    return %c0_i32, %arg2 : i32, i32
  }
  func.func @transform_3(%arg0: i32, %arg1: i32, %arg2: i32, %arg3: i32) -> (i32, i32, i32) {
    %c0_i32 = arith.constant 0 : i32
    return %arg0, %arg1, %arg2 : i32, i32, i32
  }
}

</mosaic_0001>

<llo_original>
// kernel: tpu_custom_call.1
$region0: #{tpu_custom_call.1}
  #allocation0 [shape = 'u32[]', space=smem, size = 0x4, offset = 0x4, fixed_abs, tag = 'smem constant byte address 0x4 - core index']
  #allocation1 [shape = 'u32[144,128]{1,0:T(1,128)}', space=vmem, size = 0x12000, scoped, tag = 'internal scratch']
  #allocation2 [shape = 'f32[128,128]{1,0:T(8,128)}', space=vmem, size = 0x10000, scoped, tag = 'scratch operand']
  %s0 = inlined_call_operand.hbm [shape: f32[2,128,128], index: 0, kind: input, shape index: {}]
  %s1 = inlined_call_operand.hbm [shape: f32[128,128], index: 1, kind: input, shape index: {}]
  %s2 = inlined_call_operand.vmem [shape: f32[1,128], index: 2, kind: input, shape index: {}]
  %s3 = inlined_call_operand.hbm [shape: f32[2,128,128], index: 3, kind: output, shape index: {}]
  %s4 = sld [smem:[#allocation0]]
  $region61: #{tpu_custom_call.1} parent=0
    _
  %s6 = ssub.s32 1, %s4
  %s7 = scalar_select 0, %s6, %s4
  $region1: #{tpu_custom_call.1} parent=0
    #allocation3 [shape = 'u8[131072]{0}', space=vmem, size = 0x20000, scoped, tag = 'input window, operand 0']
    #allocation4 [shape = 's32[2]{0}', space=sflag, size = 0x8, scoped, tag = 'scoped memory for tpu_custom_call.1']
    #allocation5 [shape = 's32[2]{0}', space=sflag, size = 0x8, scoped, tag = 'scoped memory for tpu_custom_call.1']
    #allocation6 [shape = 'u8[65536]{0}', space=vmem, size = 0x10000, scoped, tag = 'input window, operand 1, single buffered']
    #allocation7 [shape = 's32[1]{0}', space=sflag, size = 0x4, scoped, tag = 'scoped memory for tpu_custom_call.1']
    #allocation8 [shape = 'u8[131072]{0}', space=vmem, size = 0x20000, scoped, tag = 'output window, operand 0']
    %8 = vsyncpa [#allocation4], 0
    %s9 = scalar_lea.sflag [#allocation4], 1
    %10 = vsyncpa %s9, 0
    %11 = vsyncpa [#allocation7], 0
    %12 = vsyncpa [#allocation5], 0
    %s13 = scalar_lea.sflag [#allocation5], 1
    %14 = vsyncpa %s13, 0
    loop: start=0, step=1, limit=4
    $region2: #{tpu_custom_call.1} parent=1 // loop_pre_header
      _
    $region3: #{tpu_custom_call.1} parent=1 // loop_header
      %s16 = sphi 0, %s20
      %p17 = scmp.ge.s32.totalorder %s16, 4
      %s23 = sphi 0, %s49
      %s24 = sphi 0, %s45
      %s25 = sphi 0, %s41
      %s26 = sphi 0, %s37
      %s27 = sphi 0, %s23
      %s28 = sphi 0, %s24
      %s29 = sphi 0, %s25
      %s30 = sphi 0, %s26
      %s31 = sphi 0, %s27
      %s32 = sphi 0, %s28
      %s33 = sphi 0, %s29
      %s34 = sphi 0, %s30
      %s56 = sphi 0, %s58
      %s59 = sphi 0, %s56
      %s60 = sphi 0, %s59
      %s76 = sphi 0, %s60
      %s84 = sphi 0, %s86
      %s87 = sphi 0, %s84
      %s88 = sphi 0, %s87
      %s104 = sphi 0, %s88
      %s110 = sphi 0, %s112
      %s113 = sphi 0, %s110
      %s114 = sphi 0, %s113
      %s130 = sphi 0, %s114
      %s140 = sphi 0, %s142
      %s143 = sphi 0, %s140
      %s144 = sphi 0, %s143
      %s160 = sphi 0, %s144
    $region4: #{tpu_custom_call.1} parent=1 // loop_header_branch
      %19 = sbr.rel (%p17) target = $region8
    $region5: #{tpu_custom_call.1} parent=1 // loop_body
      %s21 = ssub.s32 %s16, 1
      %s22 = ssub.s32 %s16, 2
      %s35 = sadd.s32 1, %s26
      %p36 = scmp.ge.s32.totalorder %s35, 1
      %s37 = scalar_select %p36, 0, %s35
      %s38 = sadd.s32 1, %s25
      %s39 = scalar_select %p36, %s38, %s25
      %p40 = scmp.ge.s32.totalorder %s39, 1
      %s41 = scalar_select %p40, 0, %s39
      %s42 = sadd.s32 1, %s24
      %s43 = scalar_select %p40, %s42, %s24
      %p44 = scmp.ge.s32.totalorder %s43, 1
      %s45 = scalar_select %p44, 0, %s43
      %s46 = sadd.s32 1, %s23
      %s47 = scalar_select %p44, %s46, %s23
      %p48 = scmp.ge.s32.totalorder %s47, 2
      %s49 = scalar_select %p48, 0, %s47
      %s50 = ssub.s32 %s23, %s49
      %s51 = ssub.s32 %s24, %s45
      %s52 = sor.u32 %s50, %s51
      %s53 = ssub.s32 %s26, %s37
      %s54 = sor.u32 %s52, %s53
      %p55 = scmp.eq.s32.totalorder %s54, 0
      %s57 = sadd.s32 %s56, 1
      %s58 = scalar_select %p55, %s56, %s57
      %p61 = pneg %p55
      %p62 = scmp.eq.s32.totalorder %s16, 1
      %p63 = por %p61, %p62
      %p64 = scmp.ne.s32.totalorder %s56, %s59
      %p65 = scmp.eq.s32.totalorder %s16, 0
      %p66 = por %p64, %p65
      %p67 = scmp.ne.s32.totalorder %s56, %s59
      %p68 = scmp.eq.s32.totalorder %s21, 1
      %p69 = por %p67, %p68
      %p70 = scmp.ne.s32.totalorder %s59, %s60
      %p71 = scmp.eq.s32.totalorder %s21, 0
      %p72 = por %p70, %p71
      %p73 = scmp.ne.s32.totalorder %s59, %s60
      %p74 = scmp.eq.s32.totalorder %s22, 1
      %p75 = por %p73, %p74
      %p77 = scmp.ne.s32.totalorder %s60, %s76
      %p78 = scmp.eq.s32.totalorder %s22, 0
      %p79 = por %p77, %p78
      %s80 = ssub.s32 %s26, %s37
      %s81 = ssub.s32 %s25, %s41
      %s82 = sor.u32 %s80, %s81
      %p83 = scmp.eq.s32.totalorder %s82, 0
      %s85 = sadd.s32 %s84, 1
      %s86 = scalar_select %p83, %s84, %s85
      %p89 = pneg %p83
      %p90 = scmp.eq.s32.totalorder %s16, 1
      %p91 = por %p89, %p90
      %p92 = scmp.ne.s32.totalorder %s84, %s87
      %p93 = scmp.eq.s32.totalorder %s16, 0
      %p94 = por %p92, %p93
      %p95 = scmp.ne.s32.totalorder %s84, %s87
      %p96 = scmp.eq.s32.totalorder %s21, 1
      %p97 = por %p95, %p96
      %p98 = scmp.ne.s32.totalorder %s87, %s88
      %p99 = scmp.eq.s32.totalorder %s21, 0
      %p100 = por %p98, %p99
      %p101 = scmp.ne.s32.totalorder %s87, %s88
      %p102 = scmp.eq.s32.totalorder %s22, 1
      %p103 = por %p101, %p102
      %p105 = scmp.ne.s32.totalorder %s88, %s104
      %p106 = scmp.eq.s32.totalorder %s22, 0
      %p107 = por %p105, %p106
      %s108 = ssub.s32 %s25, %s41
      %p109 = scmp.eq.s32.totalorder %s108, 0
      %s111 = sadd.s32 %s110, 1
      %s112 = scalar_select %p109, %s110, %s111
      %p115 = pneg %p109
      %p116 = scmp.eq.s32.totalorder %s16, 1
      %p117 = por %p115, %p116
      %p118 = scmp.ne.s32.totalorder %s110, %s113
      %p119 = scmp.eq.s32.totalorder %s16, 0
      %p120 = por %p118, %p119
      %p121 = scmp.ne.s32.totalorder %s110, %s113
      %p122 = scmp.eq.s32.totalorder %s21, 1
      %p123 = por %p121, %p122
      %p124 = scmp.ne.s32.totalorder %s113, %s114
      %p125 = scmp.eq.s32.totalorder %s21, 0
      %p126 = por %p124, %p125
      %p127 = scmp.ne.s32.totalorder %s113, %s114
      %p128 = scmp.eq.s32.totalorder %s22, 1
      %p129 = por %p127, %p128
      %p131 = scmp.ne.s32.totalorder %s114, %s130
      %p132 = scmp.eq.s32.totalorder %s22, 0
      %p133 = por %p131, %p132
      %s134 = ssub.s32 %s23, %s49
      %s135 = ssub.s32 %s24, %s45
      %s136 = sor.u32 %s134, %s135
      %s137 = ssub.s32 %s25, %s41
      %s138 = sor.u32 %s136, %s137
      %p139 = scmp.eq.s32.totalorder %s138, 0
      %s141 = sadd.s32 %s140, 1
      %s142 = scalar_select %p139, %s140, %s141
      %p145 = pneg %p139
      %p146 = scmp.eq.s32.totalorder %s16, 1
      %p147 = por %p145, %p146
      %p148 = scmp.ne.s32.totalorder %s140, %s143
      %p149 = scmp.eq.s32.totalorder %s16, 0
      %p150 = por %p148, %p149
      %p151 = scmp.ne.s32.totalorder %s140, %s143
      %p152 = scmp.eq.s32.totalorder %s21, 1
      %p153 = por %p151, %p152
      %p154 = scmp.ne.s32.totalorder %s143, %s144
      %p155 = scmp.eq.s32.totalorder %s21, 0
      %p156 = por %p154, %p155
      %p157 = scmp.ne.s32.totalorder %s143, %s144
      %p158 = scmp.eq.s32.totalorder %s22, 1
      %p159 = por %p157, %p158
      %p161 = scmp.ne.s32.totalorder %s144, %s160
      %p162 = scmp.eq.s32.totalorder %s22, 0
      %p163 = por %p161, %p162
      %p164 = scmp.le.s32.totalorder 1, %s16
      %p165 = scmp.lt.s32.totalorder %s16, 3
      %p166 = pnand %p164, %p165
      %p167 = pneg %p166
      // Predicated region
      $region9: #{tpu_custom_call.1} parent=5 // pred_check
        _
      $region10: #{tpu_custom_call.1} parent=5 // pred_check_branch
        %169 = sbr.rel (%p166) target = $region12
      $region11: #{tpu_custom_call.1} parent=5 // pred_region
        %s170 = ssub.s32 %s16, 1
        // Predicated region
        $region13: #{tpu_custom_call.1} parent=11 // pred_check
          %p171 = pneg %p100
        $region14: #{tpu_custom_call.1} parent=11 // pred_check_branch
          %173 = sbr.rel (%p171) target = $region16
        $region15: #{tpu_custom_call.1} parent=11 // pred_region
          %s174 = smul.u32 16, %s30
          %s176 = ssub.s32 2048, 2048
          %177 = vsyncadd [#allocation7], %s176
          %s178 = sadd.s32 %s29, %s174
          %s179 = smul.addr %s178, 128
          %s180 = scalar_lea.hbm %s1, %s179
          %s181 = sshll.u32 [#allocation6], 4
          %s182 = int_to_ptr.vmem [resolvable:$true] %s181
          %187 = dma.hbm_to_vmem [thread:$0]  %s180, 2048, %s182, [#allocation7], 128, 128, 8
        $region16: #{tpu_custom_call.1} parent=11 // pred_fallthru
          _
        // Predicated region
        $region17: #{tpu_custom_call.1} parent=11 // pred_check
          %p188 = pneg %p126
        $region18: #{tpu_custom_call.1} parent=11 // pred_check_branch
          %190 = sbr.rel (%p188) target = $region20
        $region19: #{tpu_custom_call.1} parent=11 // pred_region
          %p191 = scmp.lt.s32.totalorder %s29, 0
          %s192 = scalar_select %p191, %s29, 0
          %s193 = scalar_lea.vmem %s2, %s192
        $region20: #{tpu_custom_call.1} parent=11 // pred_fallthru
          _
      $region12: #{tpu_custom_call.1} parent=5 // pred_fallthru
        _
      %p194 = scmp.lt.s32.totalorder %s16, 2
      // Predicated region
      $region21: #{tpu_custom_call.1} parent=5 // pred_check
        %p195 = pneg %p194
      $region22: #{tpu_custom_call.1} parent=5 // pred_check_branch
        %197 = sbr.rel (%p195) target = $region24
      $region23: #{tpu_custom_call.1} parent=5 // pred_region
        // Predicated region
        $region25: #{tpu_custom_call.1} parent=23 // pred_check
          %p198 = pneg %p66
        $region26: #{tpu_custom_call.1} parent=23 // pred_check_branch
          %200 = sbr.rel (%p198) target = $region28
        $region27: #{tpu_custom_call.1} parent=23 // pred_region
          %s201 = sand.u32 %s56, 1
          %s202 = scalar_lea.sflag [#allocation4], %s201
          %s203 = sand.u32 %s56, 1
          %s204 = smul.addr %s203, 128
          %s205 = scalar_lea.vmem [#allocation3], %s204
          %s206 = smul.u32 16, %s24
          %s208 = ssub.s32 2048, 2048
          %209 = vsyncadd %s202, %s208
          %s210 = sadd.s32 %s26, %s206
          %s211 = smul.addr %s23, 16
          %s212 = sadd.s32 %s210, %s211
          %s213 = smul.addr %s212, 128
          %s214 = scalar_lea.hbm %s0, %s213
          %s215 = sshll.u32 %s205, 4
          %s216 = int_to_ptr.vmem [resolvable:$true] %s215
          %221 = dma.hbm_to_vmem [thread:$0]  %s214, 2048, %s216, %s202, 128, 128, 8
        $region28: #{tpu_custom_call.1} parent=23 // pred_fallthru
          _
      $region24: #{tpu_custom_call.1} parent=5 // pred_fallthru
        _
      %p222 = scmp.le.s32.totalorder 1, %s16
      %p223 = scmp.lt.s32.totalorder %s16, 3
      %p224 = pnand %p222, %p223
      %p225 = pneg %p224
      // Predicated region
      $region29: #{tpu_custom_call.1} parent=5 // pred_check
        _
      $region30: #{tpu_custom_call.1} parent=5 // pred_check_branch
        %227 = sbr.rel (%p224) target = $region32
      $region31: #{tpu_custom_call.1} parent=5 // pred_region
        %s228 = ssub.s32 %s16, 1
        %s229 = sand.u32 %s59, 1
        %s230 = scalar_lea.sflag [#allocation4], %s229
        %s231 = sand.u32 %s59, 1
        %s232 = smul.addr %s231, 128
        %s233 = scalar_lea.vmem [#allocation3], %s232
        // Predicated region
        $region33: #{tpu_custom_call.1} parent=31 // pred_check
          %p234 = pneg %p72
        $region34: #{tpu_custom_call.1} parent=31 // pred_check_branch
          %236 = sbr.rel (%p234) target = $region36
        $region35: #{tpu_custom_call.1} parent=31 // pred_region
          %237 = dma.done %s230, 2048
        $region36: #{tpu_custom_call.1} parent=31 // pred_fallthru
          _
        // Predicated region
        $region37: #{tpu_custom_call.1} parent=31 // pred_check
          %p238 = pneg %p100
        $region38: #{tpu_custom_call.1} parent=31 // pred_check_branch
          %240 = sbr.rel (%p238) target = $region40
        $region39: #{tpu_custom_call.1} parent=31 // pred_region
          %241 = dma.done [#allocation7], 2048
        $region40: #{tpu_custom_call.1} parent=31 // pred_fallthru
          _
        %s242 = sand.u32 %s59, 1
        %s243 = scalar_lea.sflag [#allocation4], %s242
        %s244 = sand.u32 %s59, 1
        %s245 = smul.addr %s244, 128
        %s246 = scalar_lea.vmem [#allocation3], %s245
        %p247 = pneg %p72
        %p248 = pneg %p69
        %p249 = pneg %p100
        %p250 = pneg %p97
        %p251 = scmp.lt.s32.totalorder %s29, 0
        %s252 = scalar_select %p251, %s29, 0
        %s253 = scalar_lea.vmem %s2, %s252
        %p254 = pneg %p126
        %p255 = pneg %p123
        %p256 = pneg %p156
        %p257 = pneg %p153
        %s258 = sand.u32 %s143, 1
        %s259 = scalar_lea.sflag [#allocation5], %s258
        %s260 = sand.u32 %s143, 1
        %s261 = smul.addr %s260, 128
        %s262 = scalar_lea.vmem [#allocation8], %s261
        %s263 = smul.u32 16, %s28
        %s264 = smul.u32 16, %s30
        %p265 = scmp.lt.s32.totalorder %s29, 0
        %s266 = scalar_select %p265, %s29, 0
        %s267 = scalar_lea.vmem %s2, %s266
        %s268 = smul.u32 16, %s28
        %p269 = scmp.eq.s32.totalorder %s30, 0
        // Predicated region
        $region41: #{tpu_custom_call.1} parent=31 // pred_check
          %p270 = pneg %p269
        $region42: #{tpu_custom_call.1} parent=31 // pred_check_branch
          %272 = sbr.rel (%p270) target = $region44
        $region43: #{tpu_custom_call.1} parent=31 // pred_region
          %273 = vst [vmem:[#allocation2] sm:$0xff] 0.0
          %274 = vst [vmem:[#allocation2 + $0x8] sm:$0xff] 0.0
          %275 = vst [vmem:[#allocation2 + $0x10] sm:$0xff] 0.0
          %276 = vst [vmem:[#allocation2 + $0x18] sm:$0xff] 0.0
          %277 = vst [vmem:[#allocation2 + $0x20] sm:$0xff] 0.0
          %278 = vst [vmem:[#allocation2 + $0x28] sm:$0xff] 0.0
          %279 = vst [vmem:[#allocation2 + $0x30] sm:$0xff] 0.0
          %280 = vst [vmem:[#allocation2 + $0x38] sm:$0xff] 0.0
          %281 = vst [vmem:[#allocation2 + $0x40] sm:$0xff] 0.0
          %282 = vst [vmem:[#allocation2 + $0x48] sm:$0xff] 0.0
          %283 = vst [vmem:[#allocation2 + $0x50] sm:$0xff] 0.0
          %284 = vst [vmem:[#allocation2 + $0x58] sm:$0xff] 0.0
          %285 = vst [vmem:[#allocation2 + $0x60] sm:$0xff] 0.0
          %286 = vst [vmem:[#allocation2 + $0x68] sm:$0xff] 0.0
          %287 = vst [vmem:[#allocation2 + $0x70] sm:$0xff] 0.0
          %288 = vst [vmem:[#allocation2 + $0x78] sm:$0xff] 0.0
        $region44: #{tpu_custom_call.1} parent=31 // pred_fallthru
          _
        %v289 = vld [vmem:[%s233] sm:$0xff]
        %v290 = vld [vmem:[%s233 + $0x8] sm:$0xff]
        %v291 = vld [vmem:[%s233 + $0x10] sm:$0xff]
        %v292 = vld [vmem:[%s233 + $0x18] sm:$0xff]
        %v293 = vld [vmem:[%s233 + $0x20] sm:$0xff]
        %v294 = vld [vmem:[%s233 + $0x28] sm:$0xff]
        %v295 = vld [vmem:[%s233 + $0x30] sm:$0xff]
        %v296 = vld [vmem:[%s233 + $0x38] sm:$0xff]
        %v297 = vld [vmem:[%s233 + $0x40] sm:$0xff]
        %v298 = vld [vmem:[%s233 + $0x48] sm:$0xff]
        %v299 = vld [vmem:[%s233 + $0x50] sm:$0xff]
        %v300 = vld [vmem:[%s233 + $0x58] sm:$0xff]
        %v301 = vld [vmem:[%s233 + $0x60] sm:$0xff]
        %v302 = vld [vmem:[%s233 + $0x68] sm:$0xff]
        %v303 = vld [vmem:[%s233 + $0x70] sm:$0xff]
        %v304 = vld [vmem:[%s233 + $0x78] sm:$0xff]
        %v305 = vld [vmem:[#allocation2] sm:$0xff]
        %v306 = vld [vmem:[#allocation2 + $0x8] sm:$0xff]
        %v307 = vld [vmem:[#allocation2 + $0x10] sm:$0xff]
        %v308 = vld [vmem:[#allocation2 + $0x18] sm:$0xff]
        %v309 = vld [vmem:[#allocation2 + $0x20] sm:$0xff]
        %v310 = vld [vmem:[#allocation2 + $0x28] sm:$0xff]
        %v311 = vld [vmem:[#allocation2 + $0x30] sm:$0xff]
        %v312 = vld [vmem:[#allocation2 + $0x38] sm:$0xff]
        %v313 = vld [vmem:[#allocation2 + $0x40] sm:$0xff]
        %v314 = vld [vmem:[#allocation2 + $0x48] sm:$0xff]
        %v315 = vld [vmem:[#allocation2 + $0x50] sm:$0xff]
        %v316 = vld [vmem:[#allocation2 + $0x58] sm:$0xff]
        %v317 = vld [vmem:[#allocation2 + $0x60] sm:$0xff]
        %v318 = vld [vmem:[#allocation2 + $0x68] sm:$0xff]
        %v319 = vld [vmem:[#allocation2 + $0x70] sm:$0xff]
        %v320 = vld [vmem:[#allocation2 + $0x78] sm:$0xff]
        %v321 = vld [vmem:[#allocation6] sm:$0xff]
        %v322 = vld [vmem:[#allocation6 + $0x8] sm:$0xff]
        %v323 = vld [vmem:[#allocation6 + $0x10] sm:$0xff]
        %v324 = vld [vmem:[#allocation6 + $0x18] sm:$0xff]
        %v325 = vld [vmem:[#allocation6 + $0x20] sm:$0xff]
        %v326 = vld [vmem:[#allocation6 + $0x28] sm:$0xff]
        %v327 = vld [vmem:[#allocation6 + $0x30] sm:$0xff]
        %v328 = vld [vmem:[#allocation6 + $0x38] sm:$0xff]
        %v329 = vld [vmem:[#allocation6 + $0x40] sm:$0xff]
        %v330 = vld [vmem:[#allocation6 + $0x48] sm:$0xff]
        %v331 = vld [vmem:[#allocation6 + $0x50] sm:$0xff]
        %v332 = vld [vmem:[#allocation6 + $0x58] sm:$0xff]
        %v333 = vld [vmem:[#allocation6 + $0x60] sm:$0xff]
        %v334 = vld [vmem:[#allocation6 + $0x68] sm:$0xff]
        %v335 = vld [vmem:[#allocation6 + $0x70] sm:$0xff]
        %v336 = vld [vmem:[#allocation6 + $0x78] sm:$0xff]
        %337 = vmatprep.subr.mxu0 0.0
        %338 = vmatpush1.msra.mxu0 %v321
        %339 = vmatprep.subr.mxu0 0.0
        %340 = vmatpush1.msra.mxu0 %v322
        %341 = vmatprep.subr.mxu0 0.0
        %342 = vmatpush1.msra.mxu0 %v323
        %343 = vmatprep.subr.mxu0 0.0
        %344 = vmatpush1.msra.mxu0 %v324
        %345 = vmatprep.subr.mxu0 0.0
        %346 = vmatpush1.msra.mxu0 %v325
        %347 = vmatprep.subr.mxu0 0.0
        %348 = vmatpush1.msra.mxu0 %v326
        %349 = vmatprep.subr.mxu0 0.0
        %350 = vmatpush1.msra.mxu0 %v327
        %351 = vmatprep.subr.mxu0 0.0
        %352 = vmatpush1.msra.mxu0 %v328
        %353 = vmatprep.subr.mxu0 0.0
        %354 = vmatpush1.msra.mxu0 %v329
        %355 = vmatprep.subr.mxu0 0.0
        %356 = vmatpush1.msra.mxu0 %v330
        %357 = vmatprep.subr.mxu0 0.0
        %358 = vmatpush1.msra.mxu0 %v331
        %359 = vmatprep.subr.mxu0 0.0
        %360 = vmatpush1.msra.mxu0 %v332
        %361 = vmatprep.subr.mxu0 0.0
        %362 = vmatpush1.msra.mxu0 %v333
        %363 = vmatprep.subr.mxu0 0.0
        %364 = vmatpush1.msra.mxu0 %v334
        %365 = vmatprep.subr.mxu0 0.0
        %366 = vmatpush1.msra.mxu0 %v335
        %367 = vmatprep.subr.mxu0 0.0
        %368 = vmatpush1.msra.mxu0 %v336
        %369 = vmatprep.subr.mxu0 0.0
        %370 = vmatpush1.msra.mxu0 0.0
        %371 = vmatprep.subr.mxu0 0.0
        %372 = vmatpush1.msra.mxu0 0.0
        %373 = vmatprep.subr.mxu0 0.0
        %374 = vmatpush1.msra.mxu0 0.0
        %375 = vmatprep.subr.mxu0 0.0
        %376 = vmatpush1.msra.mxu0 0.0
        %377 = vmatprep.subr.mxu0 0.0
        %378 = vmatpush1.msra.mxu0 0.0
        %379 = vmatprep.subr.mxu0 0.0
        %380 = vmatpush1.msra.mxu0 0.0
        %381 = vmatprep.subr.mxu0 0.0
        %382 = vmatpush1.msra.mxu0 0.0
        %383 = vmatprep.subr.mxu0 0.0
        %384 = vmatpush1.msra.mxu0 0.0
        %385 = vmatprep.subr.mxu0 0.0
        %386 = vmatpush1.msra.mxu0 0.0
        %387 = vmatprep.subr.mxu0 0.0
        %388 = vmatpush1.msra.mxu0 0.0
        %389 = vmatprep.subr.mxu0 0.0
        %390 = vmatpush1.msra.mxu0 0.0
        %391 = vmatprep.subr.mxu0 0.0
        %392 = vmatpush1.msra.mxu0 0.0
        %393 = vmatprep.subr.mxu0 0.0
        %394 = vmatpush1.msra.mxu0 0.0
        %395 = vmatprep.subr.mxu0 0.0
        %396 = vmatpush1.msra.mxu0 0.0
        %397 = vmatprep.subr.mxu0 0.0
        %398 = vmatpush1.msra.mxu0 0.0
        %399 = vmatprep.subr.mxu0 0.0
        %400 = vmatpush1.msra.mxu0 0.0
        %401 = vmatprep.mubr.f32.mxu0 0.0
        %402 = vmatmul.mubr.f32.gmra.mrb[0].mxu0 %v289
        %v403 = vpop.f32.mrb[0].mxu0
        %v404 = vadd.f32 0.0, %v403
        %v405 = vpop.f32.mrb[0].mxu0
        %406 = vmatprep.mubr.f32.mxu0 0.0
        %407 = vmatmul.mubr.f32.gmra.mrb[0].mxu0 %v290
        %v408 = vpop.f32.mrb[0].mxu0
        %v409 = vadd.f32 0.0, %v408
        %v410 = vpop.f32.mrb[0].mxu0
        %411 = vmatprep.mubr.f32.mxu0 0.0
        %412 = vmatmul.mubr.f32.gmra.mrb[0].mxu0 %v291
        %v413 = vpop.f32.mrb[0].mxu0
        %v414 = vadd.f32 0.0, %v413
        %v415 = vpop.f32.mrb[0].mxu0
        %416 = vmatprep.mubr.f32.mxu0 0.0
        %417 = vmatmul.mubr.f32.gmra.mrb[0].mxu0 %v292
        %v418 = vpop.f32.mrb[0].mxu0
        %v419 = vadd.f32 0.0, %v418
        %v420 = vpop.f32.mrb[0].mxu0
        %421 = vmatprep.mubr.f32.mxu0 0.0
        %422 = vmatmul.mubr.f32.gmra.mrb[0].mxu0 %v293
        %v423 = vpop.f32.mrb[0].mxu0
        %v424 = vadd.f32 0.0, %v423
        %v425 = vpop.f32.mrb[0].mxu0
        %426 = vmatprep.mubr.f32.mxu0 0.0
        %427 = vmatmul.mubr.f32.gmra.mrb[0].mxu0 %v294
        %v428 = vpop.f32.mrb[0].mxu0
        %v429 = vadd.f32 0.0, %v428
        %v430 = vpop.f32.mrb[0].mxu0
        %431 = vmatprep.mubr.f32.mxu0 0.0
        %432 = vmatmul.mubr.f32.gmra.mrb[0].mxu0 %v295
        %v433 = vpop.f32.mrb[0].mxu0
        %v434 = vadd.f32 0.0, %v433
        %v435 = vpop.f32.mrb[0].mxu0
        %436 = vmatprep.mubr.f32.mxu0 0.0
        %437 = vmatmul.mubr.f32.gmra.mrb[0].mxu0 %v296
        %v438 = vpop.f32.mrb[0].mxu0
        %v439 = vadd.f32 0.0, %v438
        %v440 = vpop.f32.mrb[0].mxu0
        %441 = vmatprep.mubr.f32.mxu0 0.0
        %442 = vmatmul.mubr.f32.gmra.mrb[0].mxu0 %v297
        %v443 = vpop.f32.mrb[0].mxu0
        %v444 = vadd.f32 0.0, %v443
        %v445 = vpop.f32.mrb[0].mxu0
        %446 = vmatprep.mubr.f32.mxu0 0.0
        %447 = vmatmul.mubr.f32.gmra.mrb[0].mxu0 %v298
        %v448 = vpop.f32.mrb[0].mxu0
        %v449 = vadd.f32 0.0, %v448
        %v450 = vpop.f32.mrb[0].mxu0
        %451 = vmatprep.mubr.f32.mxu0 0.0
        %452 = vmatmul.mubr.f32.gmra.mrb[0].mxu0 %v299
        %v453 = vpop.f32.mrb[0].mxu0
        %v454 = vadd.f32 0.0, %v453
        %v455 = vpop.f32.mrb[0].mxu0
        %456 = vmatprep.mubr.f32.mxu0 0.0
        %457 = vmatmul.mubr.f32.gmra.mrb[0].mxu0 %v300
        %v458 = vpop.f32.mrb[0].mxu0
        %v459 = vadd.f32 0.0, %v458
        %v460 = vpop.f32.mrb[0].mxu0
        %461 = vmatprep.mubr.f32.mxu0 0.0
        %462 = vmatmul.mubr.f32.gmra.mrb[0].mxu0 %v301
        %v463 = vpop.f32.mrb[0].mxu0
        %v464 = vadd.f32 0.0, %v463
        %v465 = vpop.f32.mrb[0].mxu0
        %466 = vmatprep.mubr.f32.mxu0 0.0
        %467 = vmatmul.mubr.f32.gmra.mrb[0].mxu0 %v302
        %v468 = vpop.f32.mrb[0].mxu0
        %v469 = vadd.f32 0.0, %v468
        %v470 = vpop.f32.mrb[0].mxu0
        %471 = vmatprep.mubr.f32.mxu0 0.0
        %472 = vmatmul.mubr.f32.gmra.mrb[0].mxu0 %v303
        %v473 = vpop.f32.mrb[0].mxu0
        %v474 = vadd.f32 0.0, %v473
        %v475 = vpop.f32.mrb[0].mxu0
        %476 = vmatprep.mubr.f32.mxu0 0.0
        %477 = vmatmul.mubr.f32.gmra.mrb[0].mxu0 %v304
        %v478 = vpop.f32.mrb[0].mxu0
        %v479 = vadd.f32 0.0, %v478
        %v480 = vpop.f32.mrb[0].mxu0
        %481 = vdwg.mxu0
        %v482 = vadd.f32 %v305, %v404
        %v483 = vadd.f32 %v306, %v409
        %v484 = vadd.f32 %v307, %v414
        %v485 = vadd.f32 %v308, %v419
        %v486 = vadd.f32 %v309, %v424
        %v487 = vadd.f32 %v310, %v429
        %v488 = vadd.f32 %v311, %v434
        %v489 = vadd.f32 %v312, %v439
        %v490 = vadd.f32 %v313, %v444
        %v491 = vadd.f32 %v314, %v449
        %v492 = vadd.f32 %v315, %v454
        %v493 = vadd.f32 %v316, %v459
        %v494 = vadd.f32 %v317, %v464
        %v495 = vadd.f32 %v318, %v469
        %v496 = vadd.f32 %v319, %v474
        %v497 = vadd.f32 %v320, %v479
        %498 = vst [vmem:[#allocation2] sm:$0xff] %v482
        %499 = vst [vmem:[#allocation2 + $0x8] sm:$0xff] %v483
        %500 = vst [vmem:[#allocation2 + $0x10] sm:$0xff] %v484
        %501 = vst [vmem:[#allocation2 + $0x18] sm:$0xff] %v485
        %502 = vst [vmem:[#allocation2 + $0x20] sm:$0xff] %v486
        %503 = vst [vmem:[#allocation2 + $0x28] sm:$0xff] %v487
        %504 = vst [vmem:[#allocation2 + $0x30] sm:$0xff] %v488
        %505 = vst [vmem:[#allocation2 + $0x38] sm:$0xff] %v489
        %506 = vst [vmem:[#allocation2 + $0x40] sm:$0xff] %v490
        %507 = vst [vmem:[#allocation2 + $0x48] sm:$0xff] %v491
        %508 = vst [vmem:[#allocation2 + $0x50] sm:$0xff] %v492
        %509 = vst [vmem:[#allocation2 + $0x58] sm:$0xff] %v493
        %510 = vst [vmem:[#allocation2 + $0x60] sm:$0xff] %v494
        %511 = vst [vmem:[#allocation2 + $0x68] sm:$0xff] %v495
        %512 = vst [vmem:[#allocation2 + $0x70] sm:$0xff] %v496
        %513 = vst [vmem:[#allocation2 + $0x78] sm:$0xff] %v497
        // Predicated region
        $region45: #{tpu_custom_call.1} parent=31 // pred_check
          %p514 = pneg %p269
        $region46: #{tpu_custom_call.1} parent=31 // pred_check_branch
          %516 = sbr.rel (%p514) target = $region48
        $region47: #{tpu_custom_call.1} parent=31 // pred_region
          %v517 = vld [vmem:[#allocation2] sm:$0xff]
          %v518 = vld [vmem:[#allocation2 + $0x8] sm:$0xff]
          %v519 = vld [vmem:[#allocation2 + $0x10] sm:$0xff]
          %v520 = vld [vmem:[#allocation2 + $0x18] sm:$0xff]
          %v521 = vld [vmem:[#allocation2 + $0x20] sm:$0xff]
          %v522 = vld [vmem:[#allocation2 + $0x28] sm:$0xff]
          %v523 = vld [vmem:[#allocation2 + $0x30] sm:$0xff]
          %v524 = vld [vmem:[#allocation2 + $0x38] sm:$0xff]
          %v525 = vld [vmem:[#allocation2 + $0x40] sm:$0xff]
          %v526 = vld [vmem:[#allocation2 + $0x48] sm:$0xff]
          %v527 = vld [vmem:[#allocation2 + $0x50] sm:$0xff]
          %v528 = vld [vmem:[#allocation2 + $0x58] sm:$0xff]
          %v529 = vld [vmem:[#allocation2 + $0x60] sm:$0xff]
          %v530 = vld [vmem:[#allocation2 + $0x68] sm:$0xff]
          %v531 = vld [vmem:[#allocation2 + $0x70] sm:$0xff]
          %v532 = vld [vmem:[#allocation2 + $0x78] sm:$0xff]
          %v533 = vld [vmem:[%s267] sm:$0x1]
          %v535 = vlaneseq
          %v536 = vshrl.u32 %v535, 7
          %v537 = vsub.s32 0, %v536
          %v538 = vrot.slane %v533, %v537
          %v540 = vadd.f32 %v517, %v538
          %v541 = vadd.f32 %v518, %v538
          %v542 = vadd.f32 %v519, %v538
          %v543 = vadd.f32 %v520, %v538
          %v544 = vadd.f32 %v521, %v538
          %v545 = vadd.f32 %v522, %v538
          %v546 = vadd.f32 %v523, %v538
          %v547 = vadd.f32 %v524, %v538
          %v548 = vadd.f32 %v525, %v538
          %v549 = vadd.f32 %v526, %v538
          %v550 = vadd.f32 %v527, %v538
          %v551 = vadd.f32 %v528, %v538
          %v552 = vadd.f32 %v529, %v538
          %v553 = vadd.f32 %v530, %v538
          %v554 = vadd.f32 %v531, %v538
          %v555 = vadd.f32 %v532, %v538
          %556 = vst [vmem:[%s262] sm:$0xff] %v540
          %557 = vst [vmem:[%s262 + $0x8] sm:$0xff] %v541
          %558 = vst [vmem:[%s262 + $0x10] sm:$0xff] %v542
          %559 = vst [vmem:[%s262 + $0x18] sm:$0xff] %v543
          %560 = vst [vmem:[%s262 + $0x20] sm:$0xff] %v544
          %561 = vst [vmem:[%s262 + $0x28] sm:$0xff] %v545
          %562 = vst [vmem:[%s262 + $0x30] sm:$0xff] %v546
          %563 = vst [vmem:[%s262 + $0x38] sm:$0xff] %v547
          %564 = vst [vmem:[%s262 + $0x40] sm:$0xff] %v548
          %565 = vst [vmem:[%s262 + $0x48] sm:$0xff] %v549
          %566 = vst [vmem:[%s262 + $0x50] sm:$0xff] %v550
          %567 = vst [vmem:[%s262 + $0x58] sm:$0xff] %v551
          %568 = vst [vmem:[%s262 + $0x60] sm:$0xff] %v552
          %569 = vst [vmem:[%s262 + $0x68] sm:$0xff] %v553
          %570 = vst [vmem:[%s262 + $0x70] sm:$0xff] %v554
          %571 = vst [vmem:[%s262 + $0x78] sm:$0xff] %v555
        $region48: #{tpu_custom_call.1} parent=31 // pred_fallthru
          _
        %s572 = sand.u32 %s143, 1
        %s573 = scalar_lea.sflag [#allocation5], %s572
        %s574 = sand.u32 %s143, 1
        %s575 = smul.addr %s574, 128
        %s576 = scalar_lea.vmem [#allocation8], %s575
        // Predicated region
        $region49: #{tpu_custom_call.1} parent=31 // pred_check
          %p577 = pneg %p153
        $region50: #{tpu_custom_call.1} parent=31 // pred_check_branch
          %579 = sbr.rel (%p577) target = $region52
        $region51: #{tpu_custom_call.1} parent=31 // pred_region
          %s580 = smul.u32 16, %s28
          %s582 = ssub.s32 2048, 2048
          %583 = vsyncadd %s573, %s582
          %s584 = sadd.s32 %s29, %s580
          %s585 = smul.addr %s27, 16
          %s586 = sadd.s32 %s584, %s585
          %s587 = smul.addr %s586, 128
          %s588 = scalar_lea.hbm %s3, %s587
          %s589 = sshll.u32 %s576, 4
          %s590 = int_to_ptr.vmem [resolvable:$true] %s589
          %595 = dma.vmem_to_hbm [thread:$0]  %s590, 2048, %s588, %s573, 128, 128, 8
        $region52: #{tpu_custom_call.1} parent=31 // pred_fallthru
          _
      $region32: #{tpu_custom_call.1} parent=5 // pred_fallthru
        _
      %p596 = scmp.le.s32.totalorder 2, %s16
      // Predicated region
      $region53: #{tpu_custom_call.1} parent=5 // pred_check
        %p597 = pneg %p596
      $region54: #{tpu_custom_call.1} parent=5 // pred_check_branch
        %599 = sbr.rel (%p597) target = $region56
      $region55: #{tpu_custom_call.1} parent=5 // pred_region
        %s600 = ssub.s32 %s16, 2
        // Predicated region
        $region57: #{tpu_custom_call.1} parent=55 // pred_check
          %p601 = pneg %p159
        $region58: #{tpu_custom_call.1} parent=55 // pred_check_branch
          %603 = sbr.rel (%p601) target = $region60
        $region59: #{tpu_custom_call.1} parent=55 // pred_region
          %s604 = sand.u32 %s144, 1
          %s605 = scalar_lea.sflag [#allocation5], %s604
          %s606 = sand.u32 %s144, 1
          %s607 = smul.addr %s606, 128
          %s608 = scalar_lea.vmem [#allocation8], %s607
          %609 = dma.done %s605, 2048
        $region60: #{tpu_custom_call.1} parent=55 // pred_fallthru
          _
      $region56: #{tpu_custom_call.1} parent=5 // pred_fallthru
        _
    $region6: #{tpu_custom_call.1} parent=1 // loop_footer
      %s20 = sadd.s32 1, %s16
    $region7: #{tpu_custom_call.1} parent=1 // loop_footer_branch
      %15 = sbr.rel target = $region3
    $region8: #{tpu_custom_call.1} parent=1 // loop_exit
      _
    %610 = vsyncpa [#allocation4], 1
    %s611 = scalar_lea.sflag [#allocation4], 1
    %612 = vsyncpa %s611, 1
    %613 = vsyncpa [#allocation7], 1
    %614 = vsyncpa [#allocation5], 1
    %s615 = scalar_lea.sflag [#allocation5], 1
    %616 = vsyncpa %s615, 1

</llo_original>
